<compile_context>
chip_gen: v5e
topology: v5e:2x2
jax: 0.10.0
libtpu: 0.0.40
codegen_flags: <defaults>
</compile_context>

<pallas_src>
import functools

import numpy as np
import jax
import jax.numpy as jnp
from jax.experimental import pallas as pl
from jax.experimental.pallas import tpu as pltpu


def _graph_norm_kernel(size_ref, x_ref, gamma_ref, beta_ref, out_ref, *, eps, B, P):
    """One grid step = B graphs x one feature tile.

    x_ref/out_ref: (B*P, TF)   gamma_ref/beta_ref: (1, TF)   size_ref: SMEM (G_pad,)
    """
    gb = pl.program_id(0)                               # graph-block index
    gamma = gamma_ref[...].astype(jnp.float32)          # (1, TF)
    beta = beta_ref[...].astype(jnp.float32)            # (1, TF)
    p_f = jnp.float32(P)

    def one_graph(b, carry):
        n = size_ref[gb * B + b]                        # SMEM scalar read
        nf = n.astype(jnp.float32)

        r0 = b * P
        if not isinstance(b, int):                      # dynamic row offset -> hint alignment
            r0 = pl.multiple_of(r0, P)
        xs = x_ref[pl.ds(r0, P), :].astype(jnp.float32)  # (P, TF), this graph's slot

        # Padded rows are exact zeros, so the unmasked sum is the segment sum.
        mean = jnp.sum(xs, axis=0, keepdims=True) / nf               # (1, TF)

        # Unmasked second pass + exact padded-row correction:
        # each of the (P - n) zero rows contributes exactly mean^2 to sum(diff^2).
        diff = xs - mean
        ssq = jnp.sum(diff * diff, axis=0, keepdims=True)            # (1, TF)
        var = (ssq - (p_f - nf) * (mean * mean)) / (nf - 1.0)        # ddof=1 (n==1 -> NaN, like torch)
        std = jnp.sqrt(var)

        # Hoist the divide: one F-wide reciprocal, fold gamma/beta/mean into
        # per-feature scale & shift, so the per-element path is one mul + add.
        inv = pl.reciprocal(std + eps, approx=False)                 # exact
        scale = gamma * inv
        shift = beta - mean * scale

        # Direct store — this graph's rows are private to this grid step.
        out_ref[pl.ds(r0, P), :] = (xs * scale + shift).astype(out_ref.dtype)
        return carry

    if B <= 8:
        # Short, static trip count: fully unrolled for LLO scheduler visibility.
        for b in range(B):
            one_graph(b, 0)
    else:
        jax.lax.fori_loop(0, B, one_graph, 0)


def _bucket_rows(max_size):
    """Rows per graph slot: multiple of 8, bucketed to a power of two (>=8)."""
    m = max(8, ((int(max_size) + 7) // 8) * 8)
    return int(1 << int(np.ceil(np.log2(m))))


def _feature_tile(Fp, P):
    """Feature tile TF: multiple of 128, divides Fp, <= 2048 lanes, and keeps a
    single-graph (P, TF) f32 block under ~4 MiB."""
    n128 = Fp // 128
    budget = 4 << 20
    divisors = [d for d in range(1, min(n128, 16) + 1) if n128 % d == 0]
    best = divisors[0]
    for d in divisors:
        if P * 128 * d * 4 <= budget:
            best = d
    return 128 * best


def graph_norm(x, batch_num_nodes, gamma, beta, eps=1e-5):
    """x: [N, F] float32; batch_num_nodes: python list / 1-D array of segment sizes."""
    N, F = x.shape
    sizes = np.asarray(batch_num_nodes, dtype=np.int32)
    G = int(sizes.shape[0])
    assert int(sizes.sum()) == N, "segment sizes must sum to N"
    assert int(sizes.min()) >= 1, "empty graph segments are not supported (mean would be 0/0)"

    # ---- static tile geometry (bucketed to limit recompilation) ----
    P = _bucket_rows(sizes.max())                 # rows per graph slot
    Fp = ((F + 127) // 128) * 128                 # lane-dense feature width
    TF = _feature_tile(Fp, P)                     # feature tile per grid step

    # Graphs per grid step: target ~2 MiB x-block (measured sweet spot for HBM
    # roofline), capped so in-kernel per-graph code stays reasonable.
    per_graph_bytes = P * TF * 4
    B = int(max(1, min(G, (2 << 20) // per_graph_bytes, 64)))
    G_blocks = -(-G // B)
    G_pad = G_blocks * B

    # Dummy padded graph slots get size = P (all-zero rows -> var = 0, no NaN).
    sizes_pad = np.full((G_pad,), P, dtype=np.int32)
    sizes_pad[:G] = sizes

    # Destination row (in the padded [G_pad*P, Fp] slab) for each original row.
    # NOTE: for repeated calls with the same batch structure, cache `dest`.
    dest = np.concatenate(
        [g * P + np.arange(n, dtype=np.int32) for g, n in enumerate(sizes)]
    ).astype(np.int32)
    dest = jnp.asarray(dest)

    # Layout plumbing (outside the kernel): pack segments + zero-pad rows/lanes.
    x_fp = jnp.pad(x, ((0, 0), (0, Fp - F))) if Fp != F else x
    xp = jnp.zeros((G_pad * P, Fp), dtype=x.dtype).at[dest].set(x_fp)

    gamma2d = jnp.pad(jnp.reshape(gamma, (1, F)), ((0, 0), (0, Fp - F)))
    beta2d = jnp.pad(jnp.reshape(beta, (1, F)), ((0, 0), (0, Fp - F)))

    kernel = functools.partial(_graph_norm_kernel, eps=float(eps), B=B, P=P)

    # VMEM budget: double-buffered f32 in+out of a (B*P, TF) block.
    block_bytes = B * P * TF * 4
    vmem_limit = int(min(48 * 1024 * 1024, max(32 * 1024 * 1024, 8 * block_bytes)))

    out_padded = pl.pallas_call(
        kernel,
        out_shape=jax.ShapeDtypeStruct((G_pad * P, Fp), x.dtype),
        grid_spec=pltpu.PrefetchScalarGridSpec(
            num_scalar_prefetch=1,                # segment sizes -> SMEM
            grid=(G_blocks, Fp // TF),            # graph blocks x feature tiles
            in_specs=[
                pl.BlockSpec((B * P, TF), lambda gb, f, sz: (gb, f)),   # B graphs' rows
                pl.BlockSpec((1, TF), lambda gb, f, sz: (0, f)),        # gamma tile
                pl.BlockSpec((1, TF), lambda gb, f, sz: (0, f)),        # beta tile
            ],
            out_specs=pl.BlockSpec((B * P, TF), lambda gb, f, sz: (gb, f)),
        ),
        compiler_params=pltpu.CompilerParams(
            dimension_semantics=("parallel", "parallel"),   # disjoint outputs
            vmem_limit_bytes=vmem_limit,
        ),
    )(jnp.asarray(sizes_pad), xp, gamma2d, beta2d)

    # Un-pack: gather back the valid rows / features.
    return out_padded[dest, :F]


def _reference(x, batch_num_nodes, gamma, beta, eps=1e-5):
    x = np.asarray(x, dtype=np.float32)
    outs = []
    start = 0
    for n in batch_num_nodes:
        seg = x[start:start + n]
        mean = seg.mean(axis=0, keepdims=True)
        std = seg.std(axis=0, keepdims=True, ddof=1)
        outs.append((seg - mean) / (std + eps))
        start += n
    nx = np.concatenate(outs, axis=0)
    return np.asarray(gamma) * nx + np.asarray(beta)


if __name__ == "__main__":
    num_features = 32
    batch_num_nodes = [8, 10, 6]          # 3 graphs, 24 nodes total
    N = sum(batch_num_nodes)

    key = jax.random.PRNGKey(0)
    x = jax.random.normal(key, (N, num_features), dtype=jnp.float32)

    # Deterministic parameter init, matching nn.Parameter(torch.ones / zeros)
    gamma = jnp.ones((num_features,), dtype=jnp.float32)
    beta = jnp.zeros((num_features,), dtype=jnp.float32)

    out = graph_norm(x, batch_num_nodes, gamma, beta, eps=1e-5)
    out = jax.block_until_ready(out)

    ref = _reference(np.asarray(x), batch_num_nodes, np.asarray(gamma), np.asarray(beta))
    if not np.allclose(np.asarray(out), ref, atol=1e-4, rtol=1e-4):
        raise AssertionError("Pallas GraphNorm does not match reference")

    print("KERNEL_OK")
</pallas_src>

<mosaic_0001>
module attributes {stable_mosaic.version = 11 : i64} {
  func.func @_graph_norm_kernel(%arg0: i32, %arg1: i32, %arg2: memref<3xi32, #tpu.memory_space<smem>>, %arg3: memref<48x128xf32, #tpu.memory_space<vmem>>, %arg4: memref<1x128xf32, #tpu.memory_space<vmem>>, %arg5: memref<1x128xf32, #tpu.memory_space<vmem>>, %arg6: memref<48x128xf32, #tpu.memory_space<vmem>>) attributes {dimension_semantics = [#tpu.dimension_semantics<parallel>, #tpu.dimension_semantics<parallel>], iteration_bounds = array<i64: 1, 1>, scalar_prefetch = 1 : i64, scratch_operands = 0 : i64, tpu.core_type = #tpu.core_type<tc>, window_params = [{transform_indices = @transform_0, window_bounds = array<i64: 48, 128>}, {transform_indices = @transform_1, window_bounds = array<i64: 1, 128>}, {transform_indices = @transform_2, window_bounds = array<i64: 1, 128>}, {transform_indices = @transform_3, window_bounds = array<i64: 48, 128>}]} {
    %c0 = arith.constant 0 : index
    %c0_0 = arith.constant 0 : index
    %0 = vector.load %arg4[%c0, %c0_0] : memref<1x128xf32, #tpu.memory_space<vmem>>, vector<1x128xf32>
    %c0_1 = arith.constant 0 : index
    %c0_2 = arith.constant 0 : index
    %1 = vector.load %arg5[%c0_1, %c0_2] : memref<1x128xf32, #tpu.memory_space<vmem>>, vector<1x128xf32>
    %c3_i32 = arith.constant 3 : i32
    %2 = arith.muli %arg0, %c3_i32 : i32
    %c0_i32 = arith.constant 0 : i32
    %3 = arith.addi %2, %c0_i32 : i32
    %4 = arith.index_cast %3 : i32 to index
    %5 = memref.load %arg2[%4] : memref<3xi32, #tpu.memory_space<smem>>
    %6 = arith.sitofp %5 : i32 to f32
    %c0_3 = arith.constant 0 : index
    %c0_4 = arith.constant 0 : index
    %7 = vector.load %arg3[%c0_3, %c0_4] : memref<48x128xf32, #tpu.memory_space<vmem>>, vector<16x128xf32>
    %cst = arith.constant dense<0.000000e+00> : vector<128xf32>
    %8 = vector.multi_reduction <add>, %7, %cst [0] : vector<16x128xf32> to vector<128xf32>
    %9 = vector.shape_cast %8 : vector<128xf32> to vector<1x128xf32>
    %10 = vector.broadcast %6 : f32 to vector<1x128xf32>
    %11 = arith.divf %9, %10 : vector<1x128xf32>
    %12 = vector.broadcast %11 : vector<1x128xf32> to vector<16x128xf32>
    %13 = arith.subf %7, %12 : vector<16x128xf32>
    %14 = arith.mulf %13, %13 : vector<16x128xf32>
    %cst_5 = arith.constant dense<0.000000e+00> : vector<128xf32>
    %15 = vector.multi_reduction <add>, %14, %cst_5 [0] : vector<16x128xf32> to vector<128xf32>
    %16 = vector.shape_cast %15 : vector<128xf32> to vector<1x128xf32>
    %cst_6 = arith.constant 1.600000e+01 : f32
    %17 = arith.subf %cst_6, %6 : f32
    %18 = arith.mulf %11, %11 : vector<1x128xf32>
    %19 = vector.broadcast %17 : f32 to vector<1x128xf32>
    %20 = arith.mulf %19, %18 : vector<1x128xf32>
    %21 = arith.subf %16, %20 : vector<1x128xf32>
    %cst_7 = arith.constant 1.000000e+00 : f32
    %22 = arith.subf %6, %cst_7 : f32
    %23 = vector.broadcast %22 : f32 to vector<1x128xf32>
    %24 = arith.divf %21, %23 : vector<1x128xf32>
    %25 = math.sqrt %24 : vector<1x128xf32>
    %cst_8 = arith.constant 9.99999974E-6 : f32
    %26 = vector.broadcast %cst_8 : f32 to vector<1x128xf32>
    %27 = arith.addf %25, %26 : vector<1x128xf32>
    %28 = tpu.reciprocal %27 : vector<1x128xf32> -> vector<1x128xf32>
    %29 = arith.mulf %0, %28 : vector<1x128xf32>
    %30 = arith.mulf %11, %29 : vector<1x128xf32>
    %31 = arith.subf %1, %30 : vector<1x128xf32>
    %32 = vector.broadcast %29 : vector<1x128xf32> to vector<16x128xf32>
    %33 = arith.mulf %7, %32 : vector<16x128xf32>
    %34 = vector.broadcast %31 : vector<1x128xf32> to vector<16x128xf32>
    %35 = arith.addf %33, %34 : vector<16x128xf32>
    %c0_9 = arith.constant 0 : index
    %c0_10 = arith.constant 0 : index
    %36 = vector.load %arg6[%c0_9, %c0_10] : memref<48x128xf32, #tpu.memory_space<vmem>>, vector<16x128xf32>
    tpu.vector_store %arg6[%c0_9, %c0_10], %35 {strides = array<i32>} : memref<48x128xf32, #tpu.memory_space<vmem>>, vector<16x128xf32>,
    %c3_i32_11 = arith.constant 3 : i32
    %37 = arith.muli %arg0, %c3_i32_11 : i32
    %c1_i32 = arith.constant 1 : i32
    %38 = arith.addi %37, %c1_i32 : i32
    %39 = arith.index_cast %38 : i32 to index
    %40 = memref.load %arg2[%39] : memref<3xi32, #tpu.memory_space<smem>>
    %41 = arith.sitofp %40 : i32 to f32
    %c16 = arith.constant 16 : index
    %c0_12 = arith.constant 0 : index
    %42 = vector.load %arg3[%c16, %c0_12] : memref<48x128xf32, #tpu.memory_space<vmem>>, vector<16x128xf32>
    %cst_13 = arith.constant dense<0.000000e+00> : vector<128xf32>
    %43 = vector.multi_reduction <add>, %42, %cst_13 [0] : vector<16x128xf32> to vector<128xf32>
    %44 = vector.shape_cast %43 : vector<128xf32> to vector<1x128xf32>
    %45 = vector.broadcast %41 : f32 to vector<1x128xf32>
    %46 = arith.divf %44, %45 : vector<1x128xf32>
    %47 = vector.broadcast %46 : vector<1x128xf32> to vector<16x128xf32>
    %48 = arith.subf %42, %47 : vector<16x128xf32>
    %49 = arith.mulf %48, %48 : vector<16x128xf32>
    %cst_14 = arith.constant dense<0.000000e+00> : vector<128xf32>
    %50 = vector.multi_reduction <add>, %49, %cst_14 [0] : vector<16x128xf32> to vector<128xf32>
    %51 = vector.shape_cast %50 : vector<128xf32> to vector<1x128xf32>
    %cst_15 = arith.constant 1.600000e+01 : f32
    %52 = arith.subf %cst_15, %41 : f32
    %53 = arith.mulf %46, %46 : vector<1x128xf32>
    %54 = vector.broadcast %52 : f32 to vector<1x128xf32>
    %55 = arith.mulf %54, %53 : vector<1x128xf32>
    %56 = arith.subf %51, %55 : vector<1x128xf32>
    %cst_16 = arith.constant 1.000000e+00 : f32
    %57 = arith.subf %41, %cst_16 : f32
    %58 = vector.broadcast %57 : f32 to vector<1x128xf32>
    %59 = arith.divf %56, %58 : vector<1x128xf32>
    %60 = math.sqrt %59 : vector<1x128xf32>
    %cst_17 = arith.constant 9.99999974E-6 : f32
    %61 = vector.broadcast %cst_17 : f32 to vector<1x128xf32>
    %62 = arith.addf %60, %61 : vector<1x128xf32>
    %63 = tpu.reciprocal %62 : vector<1x128xf32> -> vector<1x128xf32>
    %64 = arith.mulf %0, %63 : vector<1x128xf32>
    %65 = arith.mulf %46, %64 : vector<1x128xf32>
    %66 = arith.subf %1, %65 : vector<1x128xf32>
    %67 = vector.broadcast %64 : vector<1x128xf32> to vector<16x128xf32>
    %68 = arith.mulf %42, %67 : vector<16x128xf32>
    %69 = vector.broadcast %66 : vector<1x128xf32> to vector<16x128xf32>
    %70 = arith.addf %68, %69 : vector<16x128xf32>
    %c16_18 = arith.constant 16 : index
    %c0_19 = arith.constant 0 : index
    %71 = vector.load %arg6[%c16_18, %c0_19] : memref<48x128xf32, #tpu.memory_space<vmem>>, vector<16x128xf32>
    tpu.vector_store %arg6[%c16_18, %c0_19], %70 {strides = array<i32>} : memref<48x128xf32, #tpu.memory_space<vmem>>, vector<16x128xf32>,
    %c3_i32_20 = arith.constant 3 : i32
    %72 = arith.muli %arg0, %c3_i32_20 : i32
    %c2_i32 = arith.constant 2 : i32
    %73 = arith.addi %72, %c2_i32 : i32
    %74 = arith.index_cast %73 : i32 to index
    %75 = memref.load %arg2[%74] : memref<3xi32, #tpu.memory_space<smem>>
    %76 = arith.sitofp %75 : i32 to f32
    %c32 = arith.constant 32 : index
    %c0_21 = arith.constant 0 : index
    %77 = vector.load %arg3[%c32, %c0_21] : memref<48x128xf32, #tpu.memory_space<vmem>>, vector<16x128xf32>
    %cst_22 = arith.constant dense<0.000000e+00> : vector<128xf32>
    %78 = vector.multi_reduction <add>, %77, %cst_22 [0] : vector<16x128xf32> to vector<128xf32>
    %79 = vector.shape_cast %78 : vector<128xf32> to vector<1x128xf32>
    %80 = vector.broadcast %76 : f32 to vector<1x128xf32>
    %81 = arith.divf %79, %80 : vector<1x128xf32>
    %82 = vector.broadcast %81 : vector<1x128xf32> to vector<16x128xf32>
    %83 = arith.subf %77, %82 : vector<16x128xf32>
    %84 = arith.mulf %83, %83 : vector<16x128xf32>
    %cst_23 = arith.constant dense<0.000000e+00> : vector<128xf32>
    %85 = vector.multi_reduction <add>, %84, %cst_23 [0] : vector<16x128xf32> to vector<128xf32>
    %86 = vector.shape_cast %85 : vector<128xf32> to vector<1x128xf32>
    %cst_24 = arith.constant 1.600000e+01 : f32
    %87 = arith.subf %cst_24, %76 : f32
    %88 = arith.mulf %81, %81 : vector<1x128xf32>
    %89 = vector.broadcast %87 : f32 to vector<1x128xf32>
    %90 = arith.mulf %89, %88 : vector<1x128xf32>
    %91 = arith.subf %86, %90 : vector<1x128xf32>
    %cst_25 = arith.constant 1.000000e+00 : f32
    %92 = arith.subf %76, %cst_25 : f32
    %93 = vector.broadcast %92 : f32 to vector<1x128xf32>
    %94 = arith.divf %91, %93 : vector<1x128xf32>
    %95 = math.sqrt %94 : vector<1x128xf32>
    %cst_26 = arith.constant 9.99999974E-6 : f32
    %96 = vector.broadcast %cst_26 : f32 to vector<1x128xf32>
    %97 = arith.addf %95, %96 : vector<1x128xf32>
    %98 = tpu.reciprocal %97 : vector<1x128xf32> -> vector<1x128xf32>
    %99 = arith.mulf %0, %98 : vector<1x128xf32>
    %100 = arith.mulf %81, %99 : vector<1x128xf32>
    %101 = arith.subf %1, %100 : vector<1x128xf32>
    %102 = vector.broadcast %99 : vector<1x128xf32> to vector<16x128xf32>
    %103 = arith.mulf %77, %102 : vector<16x128xf32>
    %104 = vector.broadcast %101 : vector<1x128xf32> to vector<16x128xf32>
    %105 = arith.addf %103, %104 : vector<16x128xf32>
    %c32_27 = arith.constant 32 : index
    %c0_28 = arith.constant 0 : index
    %106 = vector.load %arg6[%c32_27, %c0_28] : memref<48x128xf32, #tpu.memory_space<vmem>>, vector<16x128xf32>
    tpu.vector_store %arg6[%c32_27, %c0_28], %105 {strides = array<i32>} : memref<48x128xf32, #tpu.memory_space<vmem>>, vector<16x128xf32>,
    return
  }
  func.func @transform_0(%arg0: i32, %arg1: i32, %arg2: memref<3xi32, #tpu.memory_space<smem>>) -> (i32, i32) {
    %c0_i32 = arith.constant 0 : i32
    return %arg0, %arg1 : i32, i32
  }
  func.func @transform_1(%arg0: i32, %arg1: i32, %arg2: memref<3xi32, #tpu.memory_space<smem>>) -> (i32, i32) {
    %c0_i32 = arith.constant 0 : i32
    %c0_i32_0 = arith.constant 0 : i32
    return %c0_i32, %arg1 : i32, i32
  }
  func.func @transform_2(%arg0: i32, %arg1: i32, %arg2: memref<3xi32, #tpu.memory_space<smem>>) -> (i32, i32) {
    %c0_i32 = arith.constant 0 : i32
    %c0_i32_0 = arith.constant 0 : i32
    return %c0_i32, %arg1 : i32, i32
  }
  func.func @transform_3(%arg0: i32, %arg1: i32, %arg2: memref<3xi32, #tpu.memory_space<smem>>) -> (i32, i32) {
    %c0_i32 = arith.constant 0 : i32
    return %arg0, %arg1 : i32, i32
  }
}

</mosaic_0001>

<llo_original>
// kernel: tpu_custom_call.1
$region0: #{tpu_custom_call.1}
  #allocation0 [shape = 'u32[]', space=smem, size = 0x4, offset = 0x4, fixed_abs, tag = 'smem constant byte address 0x4 - core index']
  #allocation1 [shape = 'u32[72,128]{1,0:T(1,128)}', space=vmem, size = 0x9000, scoped, tag = 'internal scratch']
  #allocation2 [shape = 's32[1]{0}', space=sflag, size = 0x4, scoped, tag = 'scoped memory for tpu_custom_call.1']
  #allocation3 [shape = 'u8[512]{0}', space=smem, size = 0x200, scoped, tag = 'prefetched SMEM operand 0']
  %s0 = inlined_call_operand.hbm [shape: s32[3], index: 0, kind: input, shape index: {}]
  %s1 = inlined_call_operand.hbm [shape: f32[48,128], index: 1, kind: input, shape index: {}]
  %s2 = inlined_call_operand.vmem [shape: f32[1,128], index: 2, kind: input, shape index: {}]
  %s3 = inlined_call_operand.vmem [shape: f32[1,128], index: 3, kind: input, shape index: {}]
  %s4 = inlined_call_operand.hbm [shape: f32[48,128], index: 4, kind: output, shape index: {}]
  %s5 = sld [smem:[#allocation0]]
  $region26: #{tpu_custom_call.1} parent=0
    _
  %s7 = ssub.s32 1, %s5
  %s8 = scalar_select 0, %s7, %s5
  %s10 = sshll.u32 %s0, 4
  %s11 = int_to_ptr.hbm [resolvable:$true] %s10
  %13 = dma.hbm_to_smem %s11, 16, [#allocation3], [#allocation2]
  %15 = dma.done [#allocation2], 16
  %16 = sfence
  $region1: #{tpu_custom_call.1} parent=0
    #allocation4 [shape = 'u8[24576]{0}', space=vmem, size = 0x6000, scoped, tag = 'input window, operand 1, single buffered']
    #allocation5 [shape = 's32[1]{0}', space=sflag, size = 0x4, scoped, tag = 'scoped memory for tpu_custom_call.1']
    #allocation6 [shape = 's32[1]{0}', space=sflag, size = 0x4, scoped, tag = 'scoped memory for tpu_custom_call.1']
    #allocation7 [shape = 'u8[24576]{0}', space=vmem, size = 0x6000, scoped, tag = 'output window, operand 0, single buffered']
    %17 = vsyncpa [#allocation5], 0
    %18 = vsyncpa [#allocation6], 0
    // Predicated region
    $region2: #{tpu_custom_call.1} parent=1 // pred_check
      _
    $region3: #{tpu_custom_call.1} parent=1 // pred_check_branch
      %20 = sbr.rel (0) target = $region5
    $region4: #{tpu_custom_call.1} parent=1 // pred_region
      %22 = vsyncadd [#allocation5], 0
      %s23 = sshll.u32 %s1, 4
      %s24 = int_to_ptr.hbm [resolvable:$true] %s23
      %s25 = sshll.u32 [#allocation4], 4
      %s26 = int_to_ptr.vmem [resolvable:$true] %s25
      %31 = dma.hbm_to_vmem [thread:$0]  %s24, 768, %s26, [#allocation5], 128, 128, 8
    $region5: #{tpu_custom_call.1} parent=1 // pred_fallthru
      _
    // Predicated region
    $region6: #{tpu_custom_call.1} parent=1 // pred_check
      _
    $region7: #{tpu_custom_call.1} parent=1 // pred_check_branch
      %33 = sbr.rel (0) target = $region9
    $region8: #{tpu_custom_call.1} parent=1 // pred_region
      _
    $region9: #{tpu_custom_call.1} parent=1 // pred_fallthru
      _
    // Predicated region
    $region10: #{tpu_custom_call.1} parent=1 // pred_check
      _
    $region11: #{tpu_custom_call.1} parent=1 // pred_check_branch
      %35 = sbr.rel (0) target = $region13
    $region12: #{tpu_custom_call.1} parent=1 // pred_region
      _
    $region13: #{tpu_custom_call.1} parent=1 // pred_fallthru
      _
    // Predicated region
    $region14: #{tpu_custom_call.1} parent=1 // pred_check
      _
    $region15: #{tpu_custom_call.1} parent=1 // pred_check_branch
      %37 = sbr.rel (0) target = $region17
    $region16: #{tpu_custom_call.1} parent=1 // pred_region
      %39 = dma.done [#allocation5], 768
    $region17: #{tpu_custom_call.1} parent=1 // pred_fallthru
      _
    %v40 = vld [vmem:[%s2] sm:$0x1]
    %v41 = vld [vmem:[%s3] sm:$0x1]
    %s42 = smul.u32 0, 3
    %s43 = sld [smem:[#allocation3 + %s42]]
    %s44 = scvt.s32.f32 %s43
    %v45 = vld [vmem:[#allocation4] sm:$0xff]
    %v46 = vld [vmem:[#allocation4 + $0x8] sm:$0xff]
    %v47 = vadd.f32 %v45, %v46
    %v48 = vrot.slane %v47, 4
    %v49 = vadd.f32 %v47, %v48
    %v50 = vrot.slane %v49, 2
    %v51 = vadd.f32 %v49, %v50
    %v52 = vrot.slane %v51, 1
    %v53 = vadd.f32 %v51, %v52
    %v54 = vstv %s44
    %v55 = vrcp.pop %v54
    %v56 = vmul.f32 %v54, %v55
    %v57 = vsub.f32 1.0, %v56
    %v58 = vmul.f32 %v55, %v57
    %v59 = vadd.f32 %v55, %v58
    %vm60 = vweird.f32 %v54
    %vm61 = vweird.f32 %v55
    %vm62 = vmor %vm60, %vm61
    %v63 = vsel %vm62, %v55, %v59
    %v64 = vand.u32 2147483647, %v54
    %vm65 = vcmp.eq.f32.partialorder %v64, 8.507059e+37
    %v66 = vand.u32 %v54, 2147483648
    %v67 = vor.u32 1.1754944e-38, %v66
    %v68 = vsel %vm65, %v67, %v63
    %v69 = vmul.f32 %v53, %v68
    %v70 = vsub.f32 %v45, %v69
    %v71 = vsub.f32 %v46, %v69
    %v72 = vmul.f32 %v70, %v70
    %v73 = vmul.f32 %v71, %v71
    %v74 = vadd.f32 %v72, %v73
    %v75 = vrot.slane %v74, 4
    %v76 = vadd.f32 %v74, %v75
    %v77 = vrot.slane %v76, 2
    %v78 = vadd.f32 %v76, %v77
    %v79 = vrot.slane %v78, 1
    %v80 = vadd.f32 %v78, %v79
    %s81 = ssub.f32 16.0, %s44
    %v82 = vmul.f32 %v69, %v69
    %v83 = vstv %s81
    %v84 = vmul.f32 %v83, %v82
    %v85 = vsub.f32 %v80, %v84
    %s86 = ssub.f32 %s44, 1.0
    %v87 = vstv %s86
    %v88 = vrcp.pop %v87
    %v89 = vmul.f32 %v87, %v88
    %v90 = vsub.f32 1.0, %v89
    %v91 = vmul.f32 %v88, %v90
    %v92 = vadd.f32 %v88, %v91
    %vm93 = vweird.f32 %v87
    %vm94 = vweird.f32 %v88
    %vm95 = vmor %vm93, %vm94
    %v96 = vsel %vm95, %v88, %v92
    %v97 = vand.u32 2147483647, %v87
    %vm98 = vcmp.eq.f32.partialorder %v97, 8.507059e+37
    %v99 = vand.u32 %v87, 2147483648
    %v100 = vor.u32 1.1754944e-38, %v99
    %v101 = vsel %vm98, %v100, %v96
    %v102 = vmul.f32 %v85, %v101
    %v103 = vrsqrt.pop %v102
    %v104 = vmul.f32 %v103, %v102
    %v105 = vmul.f32 %v104, %v103
    %v106 = vmul.f32 0.5, %v105
    %v107 = vsub.f32 1.5, %v106
    %v108 = vmul.f32 %v103, %v107
    %v109 = vmul.f32 %v102, %v108
    %vm110 = vcmp.eq.f32.partialorder %v102, inf
    %v111 = vsel %vm110, %v102, %v109
    %vm112 = vcmp.eq.f32.partialorder %v102, 0.0
    %v113 = vand.u32 %v102, 2147483648
    %v114 = vsel %vm112, %v113, %v111
    %v115 = vadd.f32 %v114, 1e-05
    %v116 = vrcp.pop %v115
    %v117 = vmul.f32 %v115, %v116
    %v118 = vsub.f32 1.0, %v117
    %v119 = vmul.f32 %v116, %v118
    %v120 = vadd.f32 %v116, %v119
    %vm121 = vweird.f32 %v115
    %vm122 = vweird.f32 %v116
    %vm123 = vmor %vm121, %vm122
    %v124 = vsel %vm123, %v116, %v120
    %v125 = vand.u32 2147483647, %v115
    %vm126 = vcmp.eq.f32.partialorder %v125, 8.507059e+37
    %v127 = vand.u32 %v115, 2147483648
    %v128 = vor.u32 1.1754944e-38, %v127
    %v129 = vsel %vm126, %v128, %v124
    %v130 = vmul.f32 %v40, %v129
    %v131 = vmul.f32 %v69, %v130
    %v132 = vsub.f32 %v41, %v131
    %v134 = vperm.slane %v130, 0
    %v136 = vmul.f32 %v45, %v134
    %v137 = vmul.f32 %v46, %v134
    %v139 = vperm.slane %v132, 0
    %v141 = vadd.f32 %v136, %v139
    %v142 = vadd.f32 %v137, %v139
    %143 = vst [vmem:[#allocation7] sm:$0xff] %v141
    %144 = vst [vmem:[#allocation7 + $0x8] sm:$0xff] %v142
    %s145 = sadd.s32 %s42, 1
    %s146 = sld [smem:[#allocation3 + %s145]]
    %s147 = scvt.s32.f32 %s146
    %v148 = vld [vmem:[#allocation4 + $0x10] sm:$0xff]
    %v149 = vld [vmem:[#allocation4 + $0x18] sm:$0xff]
    %v150 = vadd.f32 %v148, %v149
    %v151 = vrot.slane %v150, 4
    %v152 = vadd.f32 %v150, %v151
    %v153 = vrot.slane %v152, 2
    %v154 = vadd.f32 %v152, %v153
    %v155 = vrot.slane %v154, 1
    %v156 = vadd.f32 %v154, %v155
    %v157 = vstv %s147
    %v158 = vrcp.pop %v157
    %v159 = vmul.f32 %v157, %v158
    %v160 = vsub.f32 1.0, %v159
    %v161 = vmul.f32 %v158, %v160
    %v162 = vadd.f32 %v158, %v161
    %vm163 = vweird.f32 %v157
    %vm164 = vweird.f32 %v158
    %vm165 = vmor %vm163, %vm164
    %v166 = vsel %vm165, %v158, %v162
    %v167 = vand.u32 2147483647, %v157
    %vm168 = vcmp.eq.f32.partialorder %v167, 8.507059e+37
    %v169 = vand.u32 %v157, 2147483648
    %v170 = vor.u32 1.1754944e-38, %v169
    %v171 = vsel %vm168, %v170, %v166
    %v172 = vmul.f32 %v156, %v171
    %v173 = vsub.f32 %v148, %v172
    %v174 = vsub.f32 %v149, %v172
    %v175 = vmul.f32 %v173, %v173
    %v176 = vmul.f32 %v174, %v174
    %v177 = vadd.f32 %v175, %v176
    %v178 = vrot.slane %v177, 4
    %v179 = vadd.f32 %v177, %v178
    %v180 = vrot.slane %v179, 2
    %v181 = vadd.f32 %v179, %v180
    %v182 = vrot.slane %v181, 1
    %v183 = vadd.f32 %v181, %v182
    %s184 = ssub.f32 16.0, %s147
    %v185 = vmul.f32 %v172, %v172
    %v186 = vstv %s184
    %v187 = vmul.f32 %v186, %v185
    %v188 = vsub.f32 %v183, %v187
    %s189 = ssub.f32 %s147, 1.0
    %v190 = vstv %s189
    %v191 = vrcp.pop %v190
    %v192 = vmul.f32 %v190, %v191
    %v193 = vsub.f32 1.0, %v192
    %v194 = vmul.f32 %v191, %v193
    %v195 = vadd.f32 %v191, %v194
    %vm196 = vweird.f32 %v190
    %vm197 = vweird.f32 %v191
    %vm198 = vmor %vm196, %vm197
    %v199 = vsel %vm198, %v191, %v195
    %v200 = vand.u32 2147483647, %v190
    %vm201 = vcmp.eq.f32.partialorder %v200, 8.507059e+37
    %v202 = vand.u32 %v190, 2147483648
    %v203 = vor.u32 1.1754944e-38, %v202
    %v204 = vsel %vm201, %v203, %v199
    %v205 = vmul.f32 %v188, %v204
    %v206 = vrsqrt.pop %v205
    %v207 = vmul.f32 %v206, %v205
    %v208 = vmul.f32 %v207, %v206
    %v209 = vmul.f32 0.5, %v208
    %v210 = vsub.f32 1.5, %v209
    %v211 = vmul.f32 %v206, %v210
    %v212 = vmul.f32 %v205, %v211
    %vm213 = vcmp.eq.f32.partialorder %v205, inf
    %v214 = vsel %vm213, %v205, %v212
    %vm215 = vcmp.eq.f32.partialorder %v205, 0.0
    %v216 = vand.u32 %v205, 2147483648
    %v217 = vsel %vm215, %v216, %v214
    %v218 = vadd.f32 %v217, 1e-05
    %v219 = vrcp.pop %v218
    %v220 = vmul.f32 %v218, %v219
    %v221 = vsub.f32 1.0, %v220
    %v222 = vmul.f32 %v219, %v221
    %v223 = vadd.f32 %v219, %v222
    %vm224 = vweird.f32 %v218
    %vm225 = vweird.f32 %v219
    %vm226 = vmor %vm224, %vm225
    %v227 = vsel %vm226, %v219, %v223
    %v228 = vand.u32 2147483647, %v218
    %vm229 = vcmp.eq.f32.partialorder %v228, 8.507059e+37
    %v230 = vand.u32 %v218, 2147483648
    %v231 = vor.u32 1.1754944e-38, %v230
    %v232 = vsel %vm229, %v231, %v227
    %v233 = vmul.f32 %v40, %v232
    %v234 = vmul.f32 %v172, %v233
    %v235 = vsub.f32 %v41, %v234
    %v237 = vperm.slane %v233, 0
    %v239 = vmul.f32 %v148, %v237
    %v240 = vmul.f32 %v149, %v237
    %v242 = vperm.slane %v235, 0
    %v244 = vadd.f32 %v239, %v242
    %v245 = vadd.f32 %v240, %v242
    %246 = vst [vmem:[#allocation7 + $0x10] sm:$0xff] %v244
    %247 = vst [vmem:[#allocation7 + $0x18] sm:$0xff] %v245
    %s248 = sadd.s32 %s42, 2
    %s249 = sld [smem:[#allocation3 + %s248]]
    %s250 = scvt.s32.f32 %s249
    %v251 = vld [vmem:[#allocation4 + $0x20] sm:$0xff]
    %v252 = vld [vmem:[#allocation4 + $0x28] sm:$0xff]
    %v253 = vadd.f32 %v251, %v252
    %v254 = vrot.slane %v253, 4
    %v255 = vadd.f32 %v253, %v254
    %v256 = vrot.slane %v255, 2
    %v257 = vadd.f32 %v255, %v256
    %v258 = vrot.slane %v257, 1
    %v259 = vadd.f32 %v257, %v258
    %v260 = vstv %s250
    %v261 = vrcp.pop %v260
    %v262 = vmul.f32 %v260, %v261
    %v263 = vsub.f32 1.0, %v262
    %v264 = vmul.f32 %v261, %v263
    %v265 = vadd.f32 %v261, %v264
    %vm266 = vweird.f32 %v260
    %vm267 = vweird.f32 %v261
    %vm268 = vmor %vm266, %vm267
    %v269 = vsel %vm268, %v261, %v265
    %v270 = vand.u32 2147483647, %v260
    %vm271 = vcmp.eq.f32.partialorder %v270, 8.507059e+37
    %v272 = vand.u32 %v260, 2147483648
    %v273 = vor.u32 1.1754944e-38, %v272
    %v274 = vsel %vm271, %v273, %v269
    %v275 = vmul.f32 %v259, %v274
    %v276 = vsub.f32 %v251, %v275
    %v277 = vsub.f32 %v252, %v275
    %v278 = vmul.f32 %v276, %v276
    %v279 = vmul.f32 %v277, %v277
    %v280 = vadd.f32 %v278, %v279
    %v281 = vrot.slane %v280, 4
    %v282 = vadd.f32 %v280, %v281
    %v283 = vrot.slane %v282, 2
    %v284 = vadd.f32 %v282, %v283
    %v285 = vrot.slane %v284, 1
    %v286 = vadd.f32 %v284, %v285
    %s287 = ssub.f32 16.0, %s250
    %v288 = vmul.f32 %v275, %v275
    %v289 = vstv %s287
    %v290 = vmul.f32 %v289, %v288
    %v291 = vsub.f32 %v286, %v290
    %s292 = ssub.f32 %s250, 1.0
    %v293 = vstv %s292
    %v294 = vrcp.pop %v293
    %v295 = vmul.f32 %v293, %v294
    %v296 = vsub.f32 1.0, %v295
    %v297 = vmul.f32 %v294, %v296
    %v298 = vadd.f32 %v294, %v297
    %vm299 = vweird.f32 %v293
    %vm300 = vweird.f32 %v294
    %vm301 = vmor %vm299, %vm300
    %v302 = vsel %vm301, %v294, %v298
    %v303 = vand.u32 2147483647, %v293
    %vm304 = vcmp.eq.f32.partialorder %v303, 8.507059e+37
    %v305 = vand.u32 %v293, 2147483648
    %v306 = vor.u32 1.1754944e-38, %v305
    %v307 = vsel %vm304, %v306, %v302
    %v308 = vmul.f32 %v291, %v307
    %v309 = vrsqrt.pop %v308
    %v310 = vmul.f32 %v309, %v308
    %v311 = vmul.f32 %v310, %v309
    %v312 = vmul.f32 0.5, %v311
    %v313 = vsub.f32 1.5, %v312
    %v314 = vmul.f32 %v309, %v313
    %v315 = vmul.f32 %v308, %v314
    %vm316 = vcmp.eq.f32.partialorder %v308, inf
    %v317 = vsel %vm316, %v308, %v315
    %vm318 = vcmp.eq.f32.partialorder %v308, 0.0
    %v319 = vand.u32 %v308, 2147483648
    %v320 = vsel %vm318, %v319, %v317
    %v321 = vadd.f32 %v320, 1e-05
    %v322 = vrcp.pop %v321
    %v323 = vmul.f32 %v321, %v322
    %v324 = vsub.f32 1.0, %v323
    %v325 = vmul.f32 %v322, %v324
    %v326 = vadd.f32 %v322, %v325
    %vm327 = vweird.f32 %v321
    %vm328 = vweird.f32 %v322
    %vm329 = vmor %vm327, %vm328
    %v330 = vsel %vm329, %v322, %v326
    %v331 = vand.u32 2147483647, %v321
    %vm332 = vcmp.eq.f32.partialorder %v331, 8.507059e+37
    %v333 = vand.u32 %v321, 2147483648
    %v334 = vor.u32 1.1754944e-38, %v333
    %v335 = vsel %vm332, %v334, %v330
    %v336 = vmul.f32 %v40, %v335
    %v337 = vmul.f32 %v275, %v336
    %v338 = vsub.f32 %v41, %v337
    %v340 = vperm.slane %v336, 0
    %v342 = vmul.f32 %v251, %v340
    %v343 = vmul.f32 %v252, %v340
    %v345 = vperm.slane %v338, 0
    %v347 = vadd.f32 %v342, %v345
    %v348 = vadd.f32 %v343, %v345
    %349 = vst [vmem:[#allocation7 + $0x20] sm:$0xff] %v347
    %350 = vst [vmem:[#allocation7 + $0x28] sm:$0xff] %v348
    // Predicated region
    $region18: #{tpu_custom_call.1} parent=1 // pred_check
      _
    $region19: #{tpu_custom_call.1} parent=1 // pred_check_branch
      %352 = sbr.rel (0) target = $region21
    $region20: #{tpu_custom_call.1} parent=1 // pred_region
      %354 = vsyncadd [#allocation6], 0
      %s355 = sshll.u32 [#allocation7], 4
      %s356 = int_to_ptr.vmem [resolvable:$true] %s355
      %s357 = sshll.u32 %s4, 4
      %s358 = int_to_ptr.hbm [resolvable:$true] %s357
      %363 = dma.vmem_to_hbm [thread:$0]  %s356, 768, %s358, [#allocation6], 128, 128, 8
    $region21: #{tpu_custom_call.1} parent=1 // pred_fallthru
      _
    // Predicated region
    $region22: #{tpu_custom_call.1} parent=1 // pred_check
      _
    $region23: #{tpu_custom_call.1} parent=1 // pred_check_branch
      %365 = sbr.rel (0) target = $region25
    $region24: #{tpu_custom_call.1} parent=1 // pred_region
      %367 = dma.done [#allocation6], 768
    $region25: #{tpu_custom_call.1} parent=1 // pred_fallthru
      _
    %368 = vsyncpa [#allocation5], 1
    %369 = vsyncpa [#allocation6], 1

</llo_original>
